<compile_context>
chip_gen: v6e
topology: v6e:2x2x1
jax: 0.10.0
libtpu: 0.0.40
codegen_flags: <defaults>
</compile_context>

<pallas_src>
import math

import jax
import jax.numpy as jnp
from jax.experimental import pallas as pl
from jax.experimental.pallas import tpu as pltpu  # noqa: F401  (TPU backend)


def _sinusoidal_pe(max_len: int, d_model: int) -> jnp.ndarray:
    """Same construction as PositionalEncoding.__init__ (even d_model only)."""
    assert d_model % 2 == 0, "d_model must be even (matches the PyTorch module)"
    position = jnp.arange(max_len, dtype=jnp.float32)[:, None]            # (L, 1)
    div_term = jnp.exp(jnp.arange(0, d_model, 2, dtype=jnp.float32)
                       * (-math.log(10000.0) / d_model))                   # (E/2,)
    ang = position * div_term                                              # (L, E/2)
    pe = jnp.zeros((max_len, d_model), dtype=jnp.float32)
    pe = pe.at[:, 0::2].set(jnp.sin(ang))
    pe = pe.at[:, 1::2].set(jnp.cos(ang))
    return pe


def _encoder_kernel(x_ref, w_ref, add_ref, o_ref):
    # x_ref  : (B, C*F)   flattened input (channel blocks along lanes)
    # w_ref  : (C*F, C*E) block-diagonal, pre-scaled weight (resident)
    # add_ref: (1, C*E)   b*sqrt(E) + PE row per channel, flattened (resident)
    # o_ref  : (B, C*E)   lane-dense output slab (8 x 128 at demo shapes)
    y = jnp.dot(x_ref[...], w_ref[...], preferred_element_type=jnp.float32)
    o_ref[...] = (y + add_ref[...]).astype(o_ref.dtype)
    # TODO(synk): dropout (p=0.25) omitted — eval/inference semantics (identity).


def encoder_forward(x, w, b, pe):
    """x: [B, n_chan, f_dim], w: [f_dim, e_dim] (x @ w form), b: [e_dim],
    pe: [max_len, e_dim]  ->  [n_chan, B, e_dim] float32."""
    B, n_chan, f_dim = x.shape
    e_dim = w.shape[1]
    scale = math.sqrt(e_dim)

    # Free, contiguous reshape (no HBM round trip).
    x2d = x.reshape(B, n_chan * f_dim)

    # Pre-folded operands (tiny; would be precomputed once in deployment).
    w_scaled = w * scale                                                  # (F, E)
    eye = jnp.eye(n_chan, dtype=w.dtype)                                  # (C, C)
    w_blk = (eye[:, None, :, None] * w_scaled[None, :, None, :]).reshape(
        n_chan * f_dim, n_chan * e_dim)                                   # blockdiag
    add_flat = (b.reshape(1, e_dim) * scale + pe[:n_chan]).reshape(
        1, n_chan * e_dim)                                                # (1, C*E)

    out2d = pl.pallas_call(
        _encoder_kernel,
        out_shape=jax.ShapeDtypeStruct((B, n_chan * e_dim), jnp.float32),
        grid=(1,),
        in_specs=[
            pl.BlockSpec((B, n_chan * f_dim), lambda i: (0, 0)),
            pl.BlockSpec((n_chan * f_dim, n_chan * e_dim), lambda i: (0, 0)),
            pl.BlockSpec((1, n_chan * e_dim), lambda i: (0, 0)),
        ],
        out_specs=pl.BlockSpec((B, n_chan * e_dim), lambda i: (0, 0)),
    )(x2d, w_blk, add_flat)

    # Small, lane-contiguous output relayout to the module's [C, B, E] layout.
    return out2d.reshape(B, n_chan, e_dim).transpose(1, 0, 2)


if __name__ == "__main__":
    # Shapes consistent with the module: Linear(f_dim=20 -> e_dim=32),
    # n_chan channels stacked as the sequence axis.
    B, n_chan, f_dim, e_dim = 8, 4, 20, 32

    key = jax.random.PRNGKey(0)
    kx, kw, kb = jax.random.split(key, 3)

    x = jax.random.normal(kx, (B, n_chan, f_dim), dtype=jnp.float32)
    # nn.Linear-style init: U(-1/sqrt(f_dim), 1/sqrt(f_dim)); w stored as x @ w.
    bound = 1.0 / math.sqrt(f_dim)
    w = jax.random.uniform(kw, (f_dim, e_dim), minval=-bound, maxval=bound,
                           dtype=jnp.float32)
    b = jax.random.uniform(kb, (e_dim,), minval=-bound, maxval=bound,
                           dtype=jnp.float32)
    pe = _sinusoidal_pe(512, e_dim)

    fwd = jax.jit(encoder_forward)
    out = jax.block_until_ready(fwd(x, w, b, pe))

    # Pure-JAX reference (same math, no Pallas).
    scale = math.sqrt(e_dim)
    ref = (jnp.einsum('bcf,fe->cbe', x, w) + b[None, None, :]) * scale \
        + pe[:n_chan][:, None, :]
    assert out.shape == (n_chan, B, e_dim)
    assert jnp.allclose(out, ref, atol=1e-4, rtol=1e-4), \
        float(jnp.max(jnp.abs(out - ref)))

    print("KERNEL_OK")
</pallas_src>

<mosaic_0001>
module attributes {stable_mosaic.version = 11 : i64} {
  func.func @_encoder_kernel(%arg0: i32, %arg1: memref<8x80xf32, #tpu.memory_space<vmem>>, %arg2: memref<80x128xf32, #tpu.memory_space<vmem>>, %arg3: memref<1x128xf32, #tpu.memory_space<vmem>>, %arg4: memref<8x128xf32, #tpu.memory_space<vmem>>) attributes {dimension_semantics = [#tpu.dimension_semantics<arbitrary>], iteration_bounds = array<i64: 1>, scalar_prefetch = 0 : i64, scratch_operands = 0 : i64, tpu.core_type = #tpu.core_type<tc>, window_params = [{pipeline_mode = #tpu.pipeline_mode<synchronous>, transform_indices = @transform_0, window_bounds = array<i64: 8, 80>}, {pipeline_mode = #tpu.pipeline_mode<synchronous>, transform_indices = @transform_1, window_bounds = array<i64: 80, 128>}, {pipeline_mode = #tpu.pipeline_mode<synchronous>, transform_indices = @transform_2, window_bounds = array<i64: 1, 128>}, {pipeline_mode = #tpu.pipeline_mode<synchronous>, transform_indices = @transform_3, window_bounds = array<i64: 8, 128>}]} {
    %c0 = arith.constant 0 : index
    %c0_0 = arith.constant 0 : index
    %0 = vector.load %arg1[%c0, %c0_0] : memref<8x80xf32, #tpu.memory_space<vmem>>, vector<8x80xf32>
    %c0_1 = arith.constant 0 : index
    %c0_2 = arith.constant 0 : index
    %1 = vector.load %arg2[%c0_1, %c0_2] : memref<80x128xf32, #tpu.memory_space<vmem>>, vector<80x128xf32>
    %cst = arith.constant dense<0.000000e+00> : vector<8x128xf32>
    %2 = tpu.matmul %0, %1, %cst {dimension_numbers = #tpu.dot_dimension_numbers<[1], [0], [0], [1], [0, 0, 1, 1], [], []>} : vector<8x80xf32>, vector<80x128xf32>, vector<8x128xf32> -> vector<8x128xf32>
    %c0_3 = arith.constant 0 : index
    %c0_4 = arith.constant 0 : index
    %3 = vector.load %arg3[%c0_3, %c0_4] : memref<1x128xf32, #tpu.memory_space<vmem>>, vector<1x128xf32>
    %4 = vector.broadcast %3 : vector<1x128xf32> to vector<8x128xf32>
    %5 = arith.addf %2, %4 : vector<8x128xf32>
    %c0_5 = arith.constant 0 : index
    %c0_6 = arith.constant 0 : index
    %6 = vector.load %arg4[%c0_5, %c0_6] : memref<8x128xf32, #tpu.memory_space<vmem>>, vector<8x128xf32>
    tpu.vector_store %arg4[%c0_5, %c0_6], %5 {strides = array<i32>} : memref<8x128xf32, #tpu.memory_space<vmem>>, vector<8x128xf32>,
    return
  }
  func.func @transform_0(%arg0: i32) -> (i32, i32) {
    %c0_i32 = arith.constant 0 : i32
    %c0_i32_0 = arith.constant 0 : i32
    %c0_i32_1 = arith.constant 0 : i32
    return %c0_i32, %c0_i32_0 : i32, i32
  }
  func.func @transform_1(%arg0: i32) -> (i32, i32) {
    %c0_i32 = arith.constant 0 : i32
    %c0_i32_0 = arith.constant 0 : i32
    %c0_i32_1 = arith.constant 0 : i32
    return %c0_i32, %c0_i32_0 : i32, i32
  }
  func.func @transform_2(%arg0: i32) -> (i32, i32) {
    %c0_i32 = arith.constant 0 : i32
    %c0_i32_0 = arith.constant 0 : i32
    %c0_i32_1 = arith.constant 0 : i32
    return %c0_i32, %c0_i32_0 : i32, i32
  }
  func.func @transform_3(%arg0: i32) -> (i32, i32) {
    %c0_i32 = arith.constant 0 : i32
    %c0_i32_0 = arith.constant 0 : i32
    %c0_i32_1 = arith.constant 0 : i32
    return %c0_i32, %c0_i32_0 : i32, i32
  }
}

</mosaic_0001>

<llo_original>
// kernel: encoder_forward.1
$region0: #{encoder_forward.1}
  #allocation0 [shape = 'u32[]', space=smem, size = 0x4, offset = 0x4, fixed_abs, tag = 'smem constant byte address 0x4 - core index']
  #allocation1 [shape = 'u32[144,128]{1,0:T(1,128)}', space=vmem, size = 0x12000, scoped, tag = 'internal scratch']
  %s0 = inlined_call_operand.vmem [shape: f32[8,80], index: 0, kind: input, shape index: {}]
  %s1 = inlined_call_operand.vmem [shape: f32[80,128], index: 1, kind: input, shape index: {}]
  %s2 = inlined_call_operand.vmem [shape: f32[1,128], index: 2, kind: input, shape index: {}]
  %s3 = inlined_call_operand.vmem [shape: f32[8,128], index: 3, kind: output, shape index: {}]
  %s4 = sld [smem:[#allocation0]]
  $region22: #{encoder_forward.1} parent=0
    _
  %s6 = ssub.s32 1, %s4
  %s7 = scalar_select 0, %s6, %s4
  // Predicated region
  $region2: #{encoder_forward.1} parent=0 // pred_check
    _
  $region3: #{encoder_forward.1} parent=0 // pred_check_branch
    %9 = sbr.rel (0) target = $region5
  $region4: #{encoder_forward.1} parent=0 // pred_region
    _
  $region5: #{encoder_forward.1} parent=0 // pred_fallthru
    _
  // Predicated region
  $region6: #{encoder_forward.1} parent=0 // pred_check
    _
  $region7: #{encoder_forward.1} parent=0 // pred_check_branch
    %11 = sbr.rel (0) target = $region9
  $region8: #{encoder_forward.1} parent=0 // pred_region
    _
  $region9: #{encoder_forward.1} parent=0 // pred_fallthru
    _
  // Predicated region
  $region10: #{encoder_forward.1} parent=0 // pred_check
    _
  $region11: #{encoder_forward.1} parent=0 // pred_check_branch
    %13 = sbr.rel (0) target = $region13
  $region12: #{encoder_forward.1} parent=0 // pred_region
    _
  $region13: #{encoder_forward.1} parent=0 // pred_fallthru
    _
  %v14 = vld [vmem:[%s0] sm:$0xff]
  %v15 = vld [vmem:[%s1] sm:$0xff]
  %v16 = vld [vmem:[%s1 + $0x8] sm:$0xff]
  %v17 = vld [vmem:[%s1 + $0x10] sm:$0xff]
  %v18 = vld [vmem:[%s1 + $0x18] sm:$0xff]
  %v19 = vld [vmem:[%s1 + $0x20] sm:$0xff]
  %v20 = vld [vmem:[%s1 + $0x28] sm:$0xff]
  %v21 = vld [vmem:[%s1 + $0x30] sm:$0xff]
  %v22 = vld [vmem:[%s1 + $0x38] sm:$0xff]
  %v23 = vld [vmem:[%s1 + $0x40] sm:$0xff]
  %v24 = vld [vmem:[%s1 + $0x48] sm:$0xff]
  %v25 = vld [vmem:[%s2] sm:$0x1]
  %v27 = vlaneseq
  %v28 = vshrl.u32 %v27, 7
  %v29 = vsub.s32 0, %v28
  %v30 = vrot.slane %v25, %v29
  %vm32 = vcmask 654336
  %v34 = vsel %vm32, %v14, 0
  %36 = vmatprep.subr.mxu0 0.0
  %37 = vmatpush1.msra.mxu0 0.0
  %38 = vmatprep.subr.mxu0 0.0
  %39 = vmatpush1.msra.mxu0 0.0
  %40 = vmatprep.subr.mxu0 0.0
  %41 = vmatpush1.msra.mxu0 0.0
  %42 = vmatprep.subr.mxu0 0.0
  %43 = vmatpush1.msra.mxu0 0.0
  %44 = vmatprep.subr.mxu0 0.0
  %45 = vmatpush1.msra.mxu0 0.0
  %46 = vmatprep.subr.mxu0 0.0
  %47 = vmatpush1.msra.mxu0 0.0
  %48 = vmatprep.subr.mxu0 0.0
  %49 = vmatpush1.msra.mxu0 %v24
  %50 = vmatprep.subr.mxu0 0.0
  %51 = vmatpush1.msra.mxu0 %v23
  %52 = vmatprep.subr.mxu0 0.0
  %53 = vmatpush1.msra.mxu0 %v22
  %54 = vmatprep.subr.mxu0 0.0
  %55 = vmatpush1.msra.mxu0 %v21
  %56 = vmatprep.subr.mxu0 0.0
  %57 = vmatpush1.msra.mxu0 %v20
  %58 = vmatprep.subr.mxu0 0.0
  %59 = vmatpush1.msra.mxu0 %v19
  %60 = vmatprep.subr.mxu0 0.0
  %61 = vmatpush1.msra.mxu0 %v18
  %62 = vmatprep.subr.mxu0 0.0
  %63 = vmatpush1.msra.mxu0 %v17
  %64 = vmatprep.subr.mxu0 0.0
  %65 = vmatpush1.msra.mxu0 %v16
  %66 = vmatprep.subr.mxu0 0.0
  %67 = vmatpush1.msra.mxu0 %v15
  %68 = vmatprep.subr.mxu0 0.0
  %69 = vmatpush2.msra.mxu0 0.0
  %70 = vmatprep.subr.mxu0 0.0
  %71 = vmatpush2.msra.mxu0 0.0
  %72 = vmatprep.subr.mxu0 0.0
  %73 = vmatpush2.msra.mxu0 0.0
  %74 = vmatprep.subr.mxu0 0.0
  %75 = vmatpush2.msra.mxu0 0.0
  %76 = vmatprep.subr.mxu0 0.0
  %77 = vmatpush2.msra.mxu0 0.0
  %78 = vmatprep.subr.mxu0 0.0
  %79 = vmatpush2.msra.mxu0 0.0
  %80 = vmatprep.subr.mxu0 0.0
  %81 = vmatpush2.msra.mxu0 0.0
  %82 = vmatprep.subr.mxu0 0.0
  %83 = vmatpush2.msra.mxu0 0.0
  %84 = vmatprep.subr.mxu0 0.0
  %85 = vmatpush2.msra.mxu0 0.0
  %86 = vmatprep.subr.mxu0 0.0
  %87 = vmatpush2.msra.mxu0 0.0
  %88 = vmatprep.subr.mxu0 0.0
  %89 = vmatpush2.msra.mxu0 0.0
  %90 = vmatprep.subr.mxu0 0.0
  %91 = vmatpush2.msra.mxu0 0.0
  %92 = vmatprep.subr.mxu0 0.0
  %93 = vmatpush2.msra.mxu0 0.0
  %94 = vmatprep.subr.mxu0 0.0
  %95 = vmatpush2.msra.mxu0 0.0
  %96 = vmatprep.subr.mxu0 0.0
  %97 = vmatpush2.msra.mxu0 0.0
  %98 = vmatprep.subr.mxu0 0.0
  %99 = vmatpush2.msra.mxu0 0.0
  %100 = vmatprep.mubr.f32.mxu0 0.0
  %101 = vmatmul.mubr.f32.gmra.mxu0 %v34
  %v102 = vpop.f32.mrf.mxu0
  %v103 = vadd.f32 %v30, %v102
  %v104 = vpop.f32.mrf.mxu0
  %105 = vdwg.mxu0
  %106 = vst [vmem:[%s3] sm:$0xff] %v103
  // Predicated region
  $region14: #{encoder_forward.1} parent=0 // pred_check
    _
  $region15: #{encoder_forward.1} parent=0 // pred_check_branch
    %108 = sbr.rel (0) target = $region17
  $region16: #{encoder_forward.1} parent=0 // pred_region
    _
  $region17: #{encoder_forward.1} parent=0 // pred_fallthru
    _
  // Predicated region
  $region18: #{encoder_forward.1} parent=0 // pred_check
    _
  $region19: #{encoder_forward.1} parent=0 // pred_check_branch
    %110 = sbr.rel (0) target = $region21
  $region20: #{encoder_forward.1} parent=0 // pred_region
    _
  $region21: #{encoder_forward.1} parent=0 // pred_fallthru
    _

</llo_original>
